<compile_context>
chip_gen: v7x
topology: tpu7x:2x2x1
jax: 0.10.0
libtpu: 0.0.40
codegen_flags: <defaults>
</compile_context>

<pallas_src>
import jax
import jax.numpy as jnp
from jax.experimental import pallas as pl
from jax.experimental.pallas import tpu as pltpu

B = 8    # batch
F = 10   # in/out feature size of every Linear layer
L = 3    # number of stacked Linear layers


def _mlp_ce_kernel(x_ref, w_ref, b_ref, y_ref, loss_ref):
    # x_ref: (B, F) f32 VMEM
    # w_ref: (L, F, F) f32 VMEM, torch (out, in) layout
    # b_ref: (L, F)   f32 VMEM
    # y_ref: (B,)     i32 SMEM  (scalar-indexed)
    # loss_ref: (1,1) f32 SMEM
    x = x_ref[...]
    w = w_ref[...]
    b = b_ref[...]

    # x @ W_i.T + b_i  == dot_general contracting axis 1 of both operands
    # (keeps torch (out, in) layout; MXU handles the transposed operand natively)
    dn = (((1,), (1,)), ((), ()))
    h = x
    for i in range(L):
        h = jax.lax.dot_general(h, w[i], dn,
                                preferred_element_type=jnp.float32) + b[i:i + 1, :]

    # numerically stable log-softmax over classes (lane axis)
    m = jnp.max(h, axis=-1, keepdims=True)                                # (B, 1)
    lse = m + jnp.log(jnp.sum(jnp.exp(h - m), axis=-1, keepdims=True))    # (B, 1)
    logp = h - lse                                                        # (B, F)

    # mean_b( -logp[b, y[b]] ): build the selection mask from B scalar SMEM
    # reads (y never touches VMEM), one select + one full reduce at the end.
    class_ids = jax.lax.broadcasted_iota(jnp.int32, (B, F), 1)
    row_ids = jax.lax.broadcasted_iota(jnp.int32, (B, F), 0)
    hit = (row_ids == 0) & (class_ids == y_ref[0])
    for i in range(1, B):
        hit = hit | ((row_ids == i) & (class_ids == y_ref[i]))

    loss = -jnp.sum(jnp.where(hit, logp, 0.0)) * (1.0 / B)
    loss_ref[0, 0] = loss


def pack_params(w1, b1, w2, b2, w3, b3):
    """Pack torch-layout (out, in) params ONCE, outside the per-step hot path."""
    w_packed = jnp.stack([w1, w2, w3], axis=0)   # (L, F, F)
    b_packed = jnp.stack([b1, b2, b3], axis=0)   # (L, F)
    return w_packed, b_packed


def mlp_cross_entropy(x, w_packed, b_packed, y):
    """x: (B,F) f32; w_packed: (L,F,F) f32 torch-layout; b_packed: (L,F) f32; y: (B,) int."""
    out = pl.pallas_call(
        _mlp_ce_kernel,
        out_shape=jax.ShapeDtypeStruct((1, 1), jnp.float32),
        in_specs=[
            pl.BlockSpec(memory_space=pltpu.VMEM),   # x
            pl.BlockSpec(memory_space=pltpu.VMEM),   # packed weights
            pl.BlockSpec(memory_space=pltpu.VMEM),   # packed biases
            pl.BlockSpec(memory_space=pltpu.SMEM),   # integer targets
        ],
        out_specs=pl.BlockSpec(memory_space=pltpu.SMEM),  # scalar loss
    )(x, w_packed, b_packed, y.astype(jnp.int32))
    return out[0, 0]


def _init_linear(key, fan_in, fan_out):
    # deterministic torch-like init: U(-1/sqrt(fan_in), 1/sqrt(fan_in))
    kw, kb = jax.random.split(key)
    bound = 1.0 / jnp.sqrt(jnp.float32(fan_in))
    w = jax.random.uniform(kw, (fan_out, fan_in), jnp.float32, -bound, bound)
    b = jax.random.uniform(kb, (fan_out,), jnp.float32, -bound, bound)
    return w, b


if __name__ == "__main__":
    key = jax.random.PRNGKey(0)
    kx, ky, k1, k2, k3 = jax.random.split(key, 5)

    x = jax.random.normal(kx, (B, F), jnp.float32)
    y = jax.random.randint(ky, (B,), 0, F, jnp.int32)

    w1, b1 = _init_linear(k1, F, F)
    w2, b2 = _init_linear(k2, F, F)
    w3, b3 = _init_linear(k3, F, F)

    # parameter packing happens once at init, not per call
    w_packed, b_packed = pack_params(w1, b1, w2, b2, w3, b3)

    loss = mlp_cross_entropy(x, w_packed, b_packed, y)
    jax.block_until_ready(loss)

    # sanity check against pure-JAX reference
    def ref(x, w1, b1, w2, b2, w3, b3, y):
        h = x @ w1.T + b1
        h = h @ w2.T + b2
        z = h @ w3.T + b3
        logp = jax.nn.log_softmax(z, axis=-1)
        return -jnp.mean(logp[jnp.arange(B), y])

    expected = ref(x, w1, b1, w2, b2, w3, b3, y)
    assert jnp.allclose(loss, expected, atol=1e-5, rtol=1e-5), (loss, expected)

    print("KERNEL_OK")
</pallas_src>

<mosaic_0001>
module attributes {stable_mosaic.version = 11 : i64} {
  func.func @_mlp_ce_kernel(%arg0: memref<8x10xf32, #tpu.memory_space<vmem>>, %arg1: memref<3x10x10xf32, #tpu.memory_space<vmem>>, %arg2: memref<3x10xf32, #tpu.memory_space<vmem>>, %arg3: memref<8xi32, #tpu.memory_space<smem>>, %arg4: memref<1x1xf32, #tpu.memory_space<smem>>) attributes {dimension_semantics = [], scalar_prefetch = 0 : i64, scratch_operands = 0 : i64, tpu.core_type = #tpu.core_type<tc>} {
    %c0 = arith.constant 0 : index
    %c0_0 = arith.constant 0 : index
    %0 = vector.load %arg0[%c0, %c0_0] : memref<8x10xf32, #tpu.memory_space<vmem>>, vector<8x10xf32>
    %c0_1 = arith.constant 0 : index
    %c0_2 = arith.constant 0 : index
    %c0_3 = arith.constant 0 : index
    %1 = vector.load %arg1[%c0_1, %c0_2, %c0_3] : memref<3x10x10xf32, #tpu.memory_space<vmem>>, vector<3x10x10xf32>
    %c0_4 = arith.constant 0 : index
    %c0_5 = arith.constant 0 : index
    %2 = vector.load %arg2[%c0_4, %c0_5] : memref<3x10xf32, #tpu.memory_space<vmem>>, vector<3x10xf32>
    %3 = vector.extract_strided_slice %1 {offsets = [0, 0, 0], sizes = [1, 10, 10], strides = [1, 1, 1]} : vector<3x10x10xf32> to vector<1x10x10xf32>
    %4 = vector.shape_cast %3 : vector<1x10x10xf32> to vector<10x10xf32>
    %cst = arith.constant dense<0.000000e+00> : vector<8x10xf32>
    %5 = tpu.matmul %0, %4, %cst {dimension_numbers = #tpu.dot_dimension_numbers<[1], [1], [0], [0], [0, 0, 1, 0], [], []>} : vector<8x10xf32>, vector<10x10xf32>, vector<8x10xf32> -> vector<8x10xf32>
    %6 = vector.extract_strided_slice %2 {offsets = [0, 0], sizes = [1, 10], strides = [1, 1]} : vector<3x10xf32> to vector<1x10xf32>
    %7 = vector.broadcast %6 : vector<1x10xf32> to vector<8x10xf32>
    %8 = arith.addf %5, %7 : vector<8x10xf32>
    %9 = vector.extract_strided_slice %1 {offsets = [1, 0, 0], sizes = [1, 10, 10], strides = [1, 1, 1]} : vector<3x10x10xf32> to vector<1x10x10xf32>
    %10 = vector.shape_cast %9 : vector<1x10x10xf32> to vector<10x10xf32>
    %cst_6 = arith.constant dense<0.000000e+00> : vector<8x10xf32>
    %11 = tpu.matmul %8, %10, %cst_6 {dimension_numbers = #tpu.dot_dimension_numbers<[1], [1], [0], [0], [0, 0, 1, 0], [], []>} : vector<8x10xf32>, vector<10x10xf32>, vector<8x10xf32> -> vector<8x10xf32>
    %12 = vector.extract_strided_slice %2 {offsets = [1, 0], sizes = [1, 10], strides = [1, 1]} : vector<3x10xf32> to vector<1x10xf32>
    %13 = vector.broadcast %12 : vector<1x10xf32> to vector<8x10xf32>
    %14 = arith.addf %11, %13 : vector<8x10xf32>
    %15 = vector.extract_strided_slice %1 {offsets = [2, 0, 0], sizes = [1, 10, 10], strides = [1, 1, 1]} : vector<3x10x10xf32> to vector<1x10x10xf32>
    %16 = vector.shape_cast %15 : vector<1x10x10xf32> to vector<10x10xf32>
    %cst_7 = arith.constant dense<0.000000e+00> : vector<8x10xf32>
    %17 = tpu.matmul %14, %16, %cst_7 {dimension_numbers = #tpu.dot_dimension_numbers<[1], [1], [0], [0], [0, 0, 1, 0], [], []>} : vector<8x10xf32>, vector<10x10xf32>, vector<8x10xf32> -> vector<8x10xf32>
    %18 = vector.extract_strided_slice %2 {offsets = [2, 0], sizes = [1, 10], strides = [1, 1]} : vector<3x10xf32> to vector<1x10xf32>
    %19 = vector.broadcast %18 : vector<1x10xf32> to vector<8x10xf32>
    %20 = arith.addf %17, %19 : vector<8x10xf32>
    %cst_8 = arith.constant dense<0xFF800000> : vector<8xf32>
    %21 = vector.multi_reduction <maximumf>, %20, %cst_8 [1] : vector<8x10xf32> to vector<8xf32>
    %22 = vector.shape_cast %21 : vector<8xf32> to vector<8x1xf32>
    %23 = vector.broadcast %22 : vector<8x1xf32> to vector<8x10xf32>
    %24 = arith.subf %20, %23 : vector<8x10xf32>
    %25 = math.exp %24 : vector<8x10xf32>
    %cst_9 = arith.constant dense<0.000000e+00> : vector<8xf32>
    %26 = vector.multi_reduction <add>, %25, %cst_9 [1] : vector<8x10xf32> to vector<8xf32>
    %27 = vector.shape_cast %26 : vector<8xf32> to vector<8x1xf32>
    %28 = math.log %27 : vector<8x1xf32>
    %29 = arith.addf %22, %28 : vector<8x1xf32>
    %30 = vector.broadcast %29 : vector<8x1xf32> to vector<8x10xf32>
    %31 = arith.subf %20, %30 : vector<8x10xf32>
    %32 = tpu.iota {dimensions = array<i32: 1>} : vector<8x10xi32>
    %33 = tpu.iota {dimensions = array<i32: 0>} : vector<8x10xi32>
    %c0_i32 = arith.constant 0 : i32
    %34 = vector.broadcast %c0_i32 : i32 to vector<8x10xi32>
    %35 = arith.cmpi eq, %33, %34 : vector<8x10xi32>
    %c0_10 = arith.constant 0 : index
    %36 = memref.load %arg3[%c0_10] : memref<8xi32, #tpu.memory_space<smem>>
    %37 = vector.broadcast %36 : i32 to vector<8x10xi32>
    %38 = arith.cmpi eq, %32, %37 : vector<8x10xi32>
    %39 = arith.andi %35, %38 : vector<8x10xi1>
    %c1_i32 = arith.constant 1 : i32
    %40 = vector.broadcast %c1_i32 : i32 to vector<8x10xi32>
    %41 = arith.cmpi eq, %33, %40 : vector<8x10xi32>
    %c1 = arith.constant 1 : index
    %42 = memref.load %arg3[%c1] : memref<8xi32, #tpu.memory_space<smem>>
    %43 = vector.broadcast %42 : i32 to vector<8x10xi32>
    %44 = arith.cmpi eq, %32, %43 : vector<8x10xi32>
    %45 = arith.andi %41, %44 : vector<8x10xi1>
    %46 = arith.ori %39, %45 : vector<8x10xi1>
    %c2_i32 = arith.constant 2 : i32
    %47 = vector.broadcast %c2_i32 : i32 to vector<8x10xi32>
    %48 = arith.cmpi eq, %33, %47 : vector<8x10xi32>
    %c2 = arith.constant 2 : index
    %49 = memref.load %arg3[%c2] : memref<8xi32, #tpu.memory_space<smem>>
    %50 = vector.broadcast %49 : i32 to vector<8x10xi32>
    %51 = arith.cmpi eq, %32, %50 : vector<8x10xi32>
    %52 = arith.andi %48, %51 : vector<8x10xi1>
    %53 = arith.ori %46, %52 : vector<8x10xi1>
    %c3_i32 = arith.constant 3 : i32
    %54 = vector.broadcast %c3_i32 : i32 to vector<8x10xi32>
    %55 = arith.cmpi eq, %33, %54 : vector<8x10xi32>
    %c3 = arith.constant 3 : index
    %56 = memref.load %arg3[%c3] : memref<8xi32, #tpu.memory_space<smem>>
    %57 = vector.broadcast %56 : i32 to vector<8x10xi32>
    %58 = arith.cmpi eq, %32, %57 : vector<8x10xi32>
    %59 = arith.andi %55, %58 : vector<8x10xi1>
    %60 = arith.ori %53, %59 : vector<8x10xi1>
    %c4_i32 = arith.constant 4 : i32
    %61 = vector.broadcast %c4_i32 : i32 to vector<8x10xi32>
    %62 = arith.cmpi eq, %33, %61 : vector<8x10xi32>
    %c4 = arith.constant 4 : index
    %63 = memref.load %arg3[%c4] : memref<8xi32, #tpu.memory_space<smem>>
    %64 = vector.broadcast %63 : i32 to vector<8x10xi32>
    %65 = arith.cmpi eq, %32, %64 : vector<8x10xi32>
    %66 = arith.andi %62, %65 : vector<8x10xi1>
    %67 = arith.ori %60, %66 : vector<8x10xi1>
    %c5_i32 = arith.constant 5 : i32
    %68 = vector.broadcast %c5_i32 : i32 to vector<8x10xi32>
    %69 = arith.cmpi eq, %33, %68 : vector<8x10xi32>
    %c5 = arith.constant 5 : index
    %70 = memref.load %arg3[%c5] : memref<8xi32, #tpu.memory_space<smem>>
    %71 = vector.broadcast %70 : i32 to vector<8x10xi32>
    %72 = arith.cmpi eq, %32, %71 : vector<8x10xi32>
    %73 = arith.andi %69, %72 : vector<8x10xi1>
    %74 = arith.ori %67, %73 : vector<8x10xi1>
    %c6_i32 = arith.constant 6 : i32
    %75 = vector.broadcast %c6_i32 : i32 to vector<8x10xi32>
    %76 = arith.cmpi eq, %33, %75 : vector<8x10xi32>
    %c6 = arith.constant 6 : index
    %77 = memref.load %arg3[%c6] : memref<8xi32, #tpu.memory_space<smem>>
    %78 = vector.broadcast %77 : i32 to vector<8x10xi32>
    %79 = arith.cmpi eq, %32, %78 : vector<8x10xi32>
    %80 = arith.andi %76, %79 : vector<8x10xi1>
    %81 = arith.ori %74, %80 : vector<8x10xi1>
    %c7_i32 = arith.constant 7 : i32
    %82 = vector.broadcast %c7_i32 : i32 to vector<8x10xi32>
    %83 = arith.cmpi eq, %33, %82 : vector<8x10xi32>
    %c7 = arith.constant 7 : index
    %84 = memref.load %arg3[%c7] : memref<8xi32, #tpu.memory_space<smem>>
    %85 = vector.broadcast %84 : i32 to vector<8x10xi32>
    %86 = arith.cmpi eq, %32, %85 : vector<8x10xi32>
    %87 = arith.andi %83, %86 : vector<8x10xi1>
    %88 = arith.ori %81, %87 : vector<8x10xi1>
    %cst_11 = arith.constant 0.000000e+00 : f32
    %89 = vector.broadcast %cst_11 : f32 to vector<8x10xf32>
    %90 = arith.select %88, %31, %89 : vector<8x10xi1>, vector<8x10xf32>
    %91 = vector.shape_cast %90 : vector<8x10xf32> to vector<1x8x10xf32>
    %cst_12 = arith.constant dense<0.000000e+00> : vector<1xf32>
    %92 = vector.multi_reduction <add>, %91, %cst_12 [1, 2] : vector<1x8x10xf32> to vector<1xf32>
    %93 = vector.shape_cast %92 : vector<1xf32> to vector<1x1x1xf32>
    %94 = vector.extract %93[0, 0, 0] : f32 from vector<1x1x1xf32>
    %cst_13 = arith.constant 0.000000e+00 : f32
    %95 = arith.subf %cst_13, %94 : f32
    %cst_14 = arith.constant 1.250000e-01 : f32
    %96 = arith.mulf %95, %cst_14 : f32
    %c0_15 = arith.constant 0 : index
    %c0_16 = arith.constant 0 : index
    %97 = memref.load %arg4[%c0_15, %c0_16] : memref<1x1xf32, #tpu.memory_space<smem>>
    memref.store %96, %arg4[%c0_15, %c0_16] : memref<1x1xf32, #tpu.memory_space<smem>>
    return
  }
}

</mosaic_0001>

<llo_original>
// kernel: tpu_custom_call.1
$region0: #{tpu_custom_call.1}
  #allocation0 [shape = 'u32[]', space=smem, size = 0x4, offset = 0x4, fixed_abs, tag = 'smem constant byte address 0x4 - core index']
  #allocation1 [shape = 'u32[144,128]{1,0:T(1,128)}', space=vmem, size = 0x12000, scoped, tag = 'internal scratch']
  %s0 = inlined_call_operand.vmem [shape: f32[8,10], index: 0, kind: input, shape index: {}]
  %s1 = inlined_call_operand.vmem [shape: f32[3,10,10], index: 1, kind: input, shape index: {}]
  %s2 = inlined_call_operand.vmem [shape: f32[3,10], index: 2, kind: input, shape index: {}]
  %s3 = inlined_call_operand.vmem [shape: s32[8], index: 3, kind: input, shape index: {}]
  %s4 = inlined_call_operand.hbm [shape: f32[1,1], index: 4, kind: output, shape index: {}]
  %s5 = sld [smem:[#allocation0]]
  $region30: #{tpu_custom_call.1} parent=0
    _
  %s7 = ssub.s32 1, %s5
  %s8 = scalar_select 0, %s7, %s5
  $region1: #{tpu_custom_call.1} parent=0
    #allocation2 [shape = 'u8[512]{0}', space=smem, size = 0x200, scoped, tag = 'input window, operand 3, single buffered']
    #allocation3 [shape = 's32[1]{0}', space=sflag, size = 0x4, scoped, tag = 'scoped memory for tpu_custom_call.1']
    #allocation4 [shape = 's32[1]{0}', space=sflag, size = 0x4, scoped, tag = 'scoped memory for tpu_custom_call.1']
    #allocation5 [shape = 'u8[512]{0}', space=smem, size = 0x200, scoped, tag = 'output window, operand 0, single buffered']
    %9 = vsyncpa [#allocation4], 0
    %10 = vsyncpa [#allocation3], 0
    // Predicated region
    $region2: #{tpu_custom_call.1} parent=1 // pred_check
      _
    $region3: #{tpu_custom_call.1} parent=1 // pred_check_branch
      %12 = sbr.rel (0) target = $region5
    $region4: #{tpu_custom_call.1} parent=1 // pred_region
      _
    $region5: #{tpu_custom_call.1} parent=1 // pred_fallthru
      _
    // Predicated region
    $region6: #{tpu_custom_call.1} parent=1 // pred_check
      _
    $region7: #{tpu_custom_call.1} parent=1 // pred_check_branch
      %14 = sbr.rel (0) target = $region9
    $region8: #{tpu_custom_call.1} parent=1 // pred_region
      _
    $region9: #{tpu_custom_call.1} parent=1 // pred_fallthru
      _
    // Predicated region
    $region10: #{tpu_custom_call.1} parent=1 // pred_check
      _
    $region11: #{tpu_custom_call.1} parent=1 // pred_check_branch
      %16 = sbr.rel (0) target = $region13
    $region12: #{tpu_custom_call.1} parent=1 // pred_region
      _
    $region13: #{tpu_custom_call.1} parent=1 // pred_fallthru
      _
    // Predicated region
    $region14: #{tpu_custom_call.1} parent=1 // pred_check
      _
    $region15: #{tpu_custom_call.1} parent=1 // pred_check_branch
      %18 = sbr.rel (0) target = $region17
    $region16: #{tpu_custom_call.1} parent=1 // pred_region
      %s20 = ssub.s32 16, 16
      %21 = vsyncadd [#allocation4], %s20
      %s23 = sshll.u32 %s3, 4
      %s24 = int_to_ptr.vmem [resolvable:$true] %s23
      %26 = dma.vmem_to_smem %s24, 16, [#allocation2], [#allocation4]
    $region17: #{tpu_custom_call.1} parent=1 // pred_fallthru
      _
    // Predicated region
    $region18: #{tpu_custom_call.1} parent=1 // pred_check
      _
    $region19: #{tpu_custom_call.1} parent=1 // pred_check_branch
      %28 = sbr.rel (0) target = $region21
    $region20: #{tpu_custom_call.1} parent=1 // pred_region
      %29 = dma.done [#allocation4], 16
    $region21: #{tpu_custom_call.1} parent=1 // pred_fallthru
      _
    %30 = sfence
    %v31 = vld [vmem:[%s0] sm:$0xff]
    %v32 = vld [vmem:[%s1] sm:$0xff]
    %v33 = vld [vmem:[%s1 + $0x8] sm:$0x3]
    %v34 = vld [vmem:[%s1 + $0x10] sm:$0xff]
    %v35 = vld [vmem:[%s1 + $0x18] sm:$0x3]
    %v36 = vld [vmem:[%s1 + $0x20] sm:$0xff]
    %v37 = vld [vmem:[%s1 + $0x28] sm:$0x3]
    %v38 = vld [vmem:[%s2] sm:$0x7]
    %v39 = vlaneseq
    %v40 = vshrl.u32 %v39, 7
    %v41 = vsub.s32 0, %v40
    %v42 = vrot.slane %v38, %v41
    %vm43 = vcmask 80896
    %v45 = vsel %vm43, %v31, 0
    %v48 = vsel %vm43, %v32, 0
    %v51 = vsel %vm43, %v33, 0
    %53 = vmatprep.subr.mxu0 0.0
    %54 = vmatpush1.xpose.msra.mxu0 %v48
    %55 = vmatprep.subr.mxu0 0.0
    %56 = vmatpush1.xpose.msra.mxu0 %v51
    %57 = vmatprep.subr.mxu0 0.0
    %58 = vmatpush1.xpose.msra.mxu0 0.0
    %59 = vmatprep.subr.mxu0 0.0
    %60 = vmatpush1.xpose.msra.mxu0 0.0
    %61 = vmatprep.subr.mxu0 0.0
    %62 = vmatpush1.xpose.msra.mxu0 0.0
    %63 = vmatprep.subr.mxu0 0.0
    %64 = vmatpush1.xpose.msra.mxu0 0.0
    %65 = vmatprep.subr.mxu0 0.0
    %66 = vmatpush1.xpose.msra.mxu0 0.0
    %67 = vmatprep.subr.mxu0 0.0
    %68 = vmatpush1.xpose.msra.mxu0 0.0
    %69 = vmatprep.subr.mxu0 0.0
    %70 = vmatpush1.xpose.msra.mxu0 0.0
    %71 = vmatprep.subr.mxu0 0.0
    %72 = vmatpush1.xpose.msra.mxu0 0.0
    %73 = vmatprep.subr.mxu0 0.0
    %74 = vmatpush1.xpose.msra.mxu0 0.0
    %75 = vmatprep.subr.mxu0 0.0
    %76 = vmatpush1.xpose.msra.mxu0 0.0
    %77 = vmatprep.subr.mxu0 0.0
    %78 = vmatpush1.xpose.msra.mxu0 0.0
    %79 = vmatprep.subr.mxu0 0.0
    %80 = vmatpush1.xpose.msra.mxu0 0.0
    %81 = vmatprep.subr.mxu0 0.0
    %82 = vmatpush1.xpose.msra.mxu0 0.0
    %83 = vmatprep.subr.mxu0 0.0
    %84 = vmatpush1.xpose.msra.mxu0 0.0
    %85 = vmatprep.subr.mxu0 0.0
    %86 = vmatpush1.xpose.msra.mxu0 0.0
    %87 = vmatprep.subr.mxu0 0.0
    %88 = vmatpush1.xpose.msra.mxu0 0.0
    %89 = vmatprep.subr.mxu0 0.0
    %90 = vmatpush1.xpose.msra.mxu0 0.0
    %91 = vmatprep.subr.mxu0 0.0
    %92 = vmatpush1.xpose.msra.mxu0 0.0
    %93 = vmatprep.subr.mxu0 0.0
    %94 = vmatpush1.xpose.msra.mxu0 0.0
    %95 = vmatprep.subr.mxu0 0.0
    %96 = vmatpush1.xpose.msra.mxu0 0.0
    %97 = vmatprep.subr.mxu0 0.0
    %98 = vmatpush1.xpose.msra.mxu0 0.0
    %99 = vmatprep.subr.mxu0 0.0
    %100 = vmatpush1.xpose.msra.mxu0 0.0
    %101 = vmatprep.subr.mxu0 0.0
    %102 = vmatpush1.xpose.msra.mxu0 0.0
    %103 = vmatprep.subr.mxu0 0.0
    %104 = vmatpush1.xpose.msra.mxu0 0.0
    %105 = vmatprep.subr.mxu0 0.0
    %106 = vmatpush1.xpose.msra.mxu0 0.0
    %107 = vmatprep.subr.mxu0 0.0
    %108 = vmatpush1.xpose.msra.mxu0 0.0
    %109 = vmatprep.subr.mxu0 0.0
    %110 = vmatpush1.xpose.msra.mxu0 0.0
    %111 = vmatprep.subr.mxu0 0.0
    %112 = vmatpush1.xpose.msra.mxu0 0.0
    %113 = vmatprep.subr.mxu0 0.0
    %114 = vmatpush1.xpose.msra.mxu0 0.0
    %115 = vmatprep.subr.mxu0 0.0
    %116 = vmatpush1.xpose.msra.mxu0 0.0
    %117 = vmatprep.mubr.f32.mxu0 0.0
    %118 = vmatmul.mubr.f32.gmra.mrb[0].mxu0 %v45
    %v119 = vpop.f32.mrb[0].mxu0
    %v120 = vadd.f32 %v42, %v119
    %v121 = vpop.f32.mrb[0].mxu0
    %122 = vdwg.mxu0
    %v123 = vlaneseq
    %v124 = vshrl.u32 %v123, 7
    %v125 = vsub.s32 1, %v124
    %v126 = vrot.slane %v38, %v125
    %v128 = vsel %vm43, %v120, 0
    %v131 = vsel %vm43, %v34, 0
    %v134 = vsel %vm43, %v35, 0
    %136 = vmatprep.subr.mxu0 0.0
    %137 = vmatpush1.xpose.msra.mxu0 %v131
    %138 = vmatprep.subr.mxu0 0.0
    %139 = vmatpush1.xpose.msra.mxu0 %v134
    %140 = vmatprep.subr.mxu0 0.0
    %141 = vmatpush1.xpose.msra.mxu0 0.0
    %142 = vmatprep.subr.mxu0 0.0
    %143 = vmatpush1.xpose.msra.mxu0 0.0
    %144 = vmatprep.subr.mxu0 0.0
    %145 = vmatpush1.xpose.msra.mxu0 0.0
    %146 = vmatprep.subr.mxu0 0.0
    %147 = vmatpush1.xpose.msra.mxu0 0.0
    %148 = vmatprep.subr.mxu0 0.0
    %149 = vmatpush1.xpose.msra.mxu0 0.0
    %150 = vmatprep.subr.mxu0 0.0
    %151 = vmatpush1.xpose.msra.mxu0 0.0
    %152 = vmatprep.subr.mxu0 0.0
    %153 = vmatpush1.xpose.msra.mxu0 0.0
    %154 = vmatprep.subr.mxu0 0.0
    %155 = vmatpush1.xpose.msra.mxu0 0.0
    %156 = vmatprep.subr.mxu0 0.0
    %157 = vmatpush1.xpose.msra.mxu0 0.0
    %158 = vmatprep.subr.mxu0 0.0
    %159 = vmatpush1.xpose.msra.mxu0 0.0
    %160 = vmatprep.subr.mxu0 0.0
    %161 = vmatpush1.xpose.msra.mxu0 0.0
    %162 = vmatprep.subr.mxu0 0.0
    %163 = vmatpush1.xpose.msra.mxu0 0.0
    %164 = vmatprep.subr.mxu0 0.0
    %165 = vmatpush1.xpose.msra.mxu0 0.0
    %166 = vmatprep.subr.mxu0 0.0
    %167 = vmatpush1.xpose.msra.mxu0 0.0
    %168 = vmatprep.subr.mxu0 0.0
    %169 = vmatpush1.xpose.msra.mxu0 0.0
    %170 = vmatprep.subr.mxu0 0.0
    %171 = vmatpush1.xpose.msra.mxu0 0.0
    %172 = vmatprep.subr.mxu0 0.0
    %173 = vmatpush1.xpose.msra.mxu0 0.0
    %174 = vmatprep.subr.mxu0 0.0
    %175 = vmatpush1.xpose.msra.mxu0 0.0
    %176 = vmatprep.subr.mxu0 0.0
    %177 = vmatpush1.xpose.msra.mxu0 0.0
    %178 = vmatprep.subr.mxu0 0.0
    %179 = vmatpush1.xpose.msra.mxu0 0.0
    %180 = vmatprep.subr.mxu0 0.0
    %181 = vmatpush1.xpose.msra.mxu0 0.0
    %182 = vmatprep.subr.mxu0 0.0
    %183 = vmatpush1.xpose.msra.mxu0 0.0
    %184 = vmatprep.subr.mxu0 0.0
    %185 = vmatpush1.xpose.msra.mxu0 0.0
    %186 = vmatprep.subr.mxu0 0.0
    %187 = vmatpush1.xpose.msra.mxu0 0.0
    %188 = vmatprep.subr.mxu0 0.0
    %189 = vmatpush1.xpose.msra.mxu0 0.0
    %190 = vmatprep.subr.mxu0 0.0
    %191 = vmatpush1.xpose.msra.mxu0 0.0
    %192 = vmatprep.subr.mxu0 0.0
    %193 = vmatpush1.xpose.msra.mxu0 0.0
    %194 = vmatprep.subr.mxu0 0.0
    %195 = vmatpush1.xpose.msra.mxu0 0.0
    %196 = vmatprep.subr.mxu0 0.0
    %197 = vmatpush1.xpose.msra.mxu0 0.0
    %198 = vmatprep.subr.mxu0 0.0
    %199 = vmatpush1.xpose.msra.mxu0 0.0
    %200 = vmatprep.mubr.f32.mxu0 0.0
    %201 = vmatmul.mubr.f32.gmra.mrb[0].mxu0 %v128
    %v202 = vpop.f32.mrb[0].mxu0
    %v203 = vadd.f32 %v126, %v202
    %v204 = vpop.f32.mrb[0].mxu0
    %205 = vdwg.mxu0
    %v206 = vlaneseq
    %v207 = vshrl.u32 %v206, 7
    %v208 = vsub.s32 2, %v207
    %v209 = vrot.slane %v38, %v208
    %v211 = vsel %vm43, %v203, 0
    %v214 = vsel %vm43, %v36, 0
    %v217 = vsel %vm43, %v37, 0
    %219 = vmatprep.subr.mxu0 0.0
    %220 = vmatpush1.xpose.msra.mxu0 %v214
    %221 = vmatprep.subr.mxu0 0.0
    %222 = vmatpush1.xpose.msra.mxu0 %v217
    %223 = vmatprep.subr.mxu0 0.0
    %224 = vmatpush1.xpose.msra.mxu0 0.0
    %225 = vmatprep.subr.mxu0 0.0
    %226 = vmatpush1.xpose.msra.mxu0 0.0
    %227 = vmatprep.subr.mxu0 0.0
    %228 = vmatpush1.xpose.msra.mxu0 0.0
    %229 = vmatprep.subr.mxu0 0.0
    %230 = vmatpush1.xpose.msra.mxu0 0.0
    %231 = vmatprep.subr.mxu0 0.0
    %232 = vmatpush1.xpose.msra.mxu0 0.0
    %233 = vmatprep.subr.mxu0 0.0
    %234 = vmatpush1.xpose.msra.mxu0 0.0
    %235 = vmatprep.subr.mxu0 0.0
    %236 = vmatpush1.xpose.msra.mxu0 0.0
    %237 = vmatprep.subr.mxu0 0.0
    %238 = vmatpush1.xpose.msra.mxu0 0.0
    %239 = vmatprep.subr.mxu0 0.0
    %240 = vmatpush1.xpose.msra.mxu0 0.0
    %241 = vmatprep.subr.mxu0 0.0
    %242 = vmatpush1.xpose.msra.mxu0 0.0
    %243 = vmatprep.subr.mxu0 0.0
    %244 = vmatpush1.xpose.msra.mxu0 0.0
    %245 = vmatprep.subr.mxu0 0.0
    %246 = vmatpush1.xpose.msra.mxu0 0.0
    %247 = vmatprep.subr.mxu0 0.0
    %248 = vmatpush1.xpose.msra.mxu0 0.0
    %249 = vmatprep.subr.mxu0 0.0
    %250 = vmatpush1.xpose.msra.mxu0 0.0
    %251 = vmatprep.subr.mxu0 0.0
    %252 = vmatpush1.xpose.msra.mxu0 0.0
    %253 = vmatprep.subr.mxu0 0.0
    %254 = vmatpush1.xpose.msra.mxu0 0.0
    %255 = vmatprep.subr.mxu0 0.0
    %256 = vmatpush1.xpose.msra.mxu0 0.0
    %257 = vmatprep.subr.mxu0 0.0
    %258 = vmatpush1.xpose.msra.mxu0 0.0
    %259 = vmatprep.subr.mxu0 0.0
    %260 = vmatpush1.xpose.msra.mxu0 0.0
    %261 = vmatprep.subr.mxu0 0.0
    %262 = vmatpush1.xpose.msra.mxu0 0.0
    %263 = vmatprep.subr.mxu0 0.0
    %264 = vmatpush1.xpose.msra.mxu0 0.0
    %265 = vmatprep.subr.mxu0 0.0
    %266 = vmatpush1.xpose.msra.mxu0 0.0
    %267 = vmatprep.subr.mxu0 0.0
    %268 = vmatpush1.xpose.msra.mxu0 0.0
    %269 = vmatprep.subr.mxu0 0.0
    %270 = vmatpush1.xpose.msra.mxu0 0.0
    %271 = vmatprep.subr.mxu0 0.0
    %272 = vmatpush1.xpose.msra.mxu0 0.0
    %273 = vmatprep.subr.mxu0 0.0
    %274 = vmatpush1.xpose.msra.mxu0 0.0
    %275 = vmatprep.subr.mxu0 0.0
    %276 = vmatpush1.xpose.msra.mxu0 0.0
    %277 = vmatprep.subr.mxu0 0.0
    %278 = vmatpush1.xpose.msra.mxu0 0.0
    %279 = vmatprep.subr.mxu0 0.0
    %280 = vmatpush1.xpose.msra.mxu0 0.0
    %281 = vmatprep.subr.mxu0 0.0
    %282 = vmatpush1.xpose.msra.mxu0 0.0
    %283 = vmatprep.mubr.f32.mxu0 0.0
    %284 = vmatmul.mubr.f32.gmra.mrb[0].mxu0 %v211
    %v285 = vpop.f32.mrb[0].mxu0
    %v286 = vadd.f32 %v209, %v285
    %v287 = vpop.f32.mrb[0].mxu0
    %288 = vdwg.mxu0
    %v289 = vsel %vm43, %v286, -inf
    %290 = vmax.xlane.f32.xlu0 %v289
    %v291 = vpop.xlane.xlu0 %290
    %v292 = vsub.f32 %v286, %v291
    %v293 = vmul.f32 %v292, 1.442695
    %v294 = vpow.pop %v293
    %v295 = vsel %vm43, %v294, 0.0
    %296 = vadd.xlane.f32.xlu0 %v295
    %v297 = vpop.xlane.xlu0 %296
    %v298 = vlog2.pop %v297
    %v299 = vmul.f32 %v298, 0.6931472
    %v300 = vadd.f32 %v291, %v299
    %v301 = vsub.f32 %v286, %v300
    %v302 = vlaneseq
    %v303 = vand.u32 %v302, 127
    %v304 = vlaneseq
    %v305 = vshrl.u32 %v304, 7
    %vm306 = vcmp.eq.s32.totalorder %v305, 0
    %s307 = sld [smem:[#allocation2]]
    %v308 = vstv %s307
    %vm309 = vcmp.eq.s32.totalorder %v303, %v308
    %vm310 = vmand %vm306, %vm309
    %vm311 = vcmp.eq.s32.totalorder %v305, 1
    %s312 = sld [smem:[#allocation2 + $0x1]]
    %v313 = vstv %s312
    %vm314 = vcmp.eq.s32.totalorder %v303, %v313
    %vm315 = vmand %vm311, %vm314
    %vm316 = vmor %vm310, %vm315
    %vm317 = vcmp.eq.s32.totalorder %v305, 2
    %s318 = sld [smem:[#allocation2 + $0x2]]
    %v319 = vstv %s318
    %vm320 = vcmp.eq.s32.totalorder %v303, %v319
    %vm321 = vmand %vm317, %vm320
    %vm322 = vmor %vm316, %vm321
    %vm323 = vcmp.eq.s32.totalorder %v305, 3
    %s324 = sld [smem:[#allocation2 + $0x3]]
    %v325 = vstv %s324
    %vm326 = vcmp.eq.s32.totalorder %v303, %v325
    %vm327 = vmand %vm323, %vm326
    %vm328 = vmor %vm322, %vm327
    %vm329 = vcmp.eq.s32.totalorder %v305, 4
    %s330 = sld [smem:[#allocation2 + $0x4]]
    %v331 = vstv %s330
    %vm332 = vcmp.eq.s32.totalorder %v303, %v331
    %vm333 = vmand %vm329, %vm332
    %vm334 = vmor %vm328, %vm333
    %vm335 = vcmp.eq.s32.totalorder %v305, 5
    %s336 = sld [smem:[#allocation2 + $0x5]]
    %v337 = vstv %s336
    %vm338 = vcmp.eq.s32.totalorder %v303, %v337
    %vm339 = vmand %vm335, %vm338
    %vm340 = vmor %vm334, %vm339
    %vm341 = vcmp.eq.s32.totalorder %v305, 6
    %s342 = sld [smem:[#allocation2 + $0x6]]
    %v343 = vstv %s342
    %vm344 = vcmp.eq.s32.totalorder %v303, %v343
    %vm345 = vmand %vm341, %vm344
    %vm346 = vmor %vm340, %vm345
    %vm347 = vcmp.eq.s32.totalorder %v305, 7
    %s348 = sld [smem:[#allocation2 + $0x7]]
    %v349 = vstv %s348
    %vm350 = vcmp.eq.s32.totalorder %v303, %v349
    %vm351 = vmand %vm347, %vm350
    %vm352 = vmor %vm346, %vm351
    %v353 = vsel %vm352, %v301, 0.0
    %v354 = vsel %vm43, %v353, 0.0
    %355 = vadd.xlane.f32.xlu0 %v354
    %v356 = vpop.xlane.xlu0 %355
    %v357 = vrot.slane %v356, 4
    %v358 = vadd.f32 %v356, %v357
    %v359 = vrot.slane %v358, 2
    %v360 = vadd.f32 %v358, %v359
    %v361 = vrot.slane %v360, 1
    %v362 = vadd.f32 %v360, %v361
    %s363 = vtos %v362
    %s364 = ssub.f32 0.0, %s363
    %s365 = smul.f32 %s364, 0.125
    %s366 = scalar_lea.smem [#allocation5], 0
    %367 = sst [smem:[%s366]] %s365
    // Predicated region
    $region22: #{tpu_custom_call.1} parent=1 // pred_check
      _
    $region23: #{tpu_custom_call.1} parent=1 // pred_check_branch
      %369 = sbr.rel (0) target = $region25
    $region24: #{tpu_custom_call.1} parent=1 // pred_region
      %s371 = ssub.s32 16, 16
      %372 = vsyncadd [#allocation3], %s371
      %375 = dma.smem_to_hbm [#allocation5], 16, %s4, [#allocation3]
    $region25: #{tpu_custom_call.1} parent=1 // pred_fallthru
      _
    // Predicated region
    $region26: #{tpu_custom_call.1} parent=1 // pred_check
      _
    $region27: #{tpu_custom_call.1} parent=1 // pred_check_branch
      %377 = sbr.rel (0) target = $region29
    $region28: #{tpu_custom_call.1} parent=1 // pred_region
      %378 = dma.done [#allocation3], 16
    $region29: #{tpu_custom_call.1} parent=1 // pred_fallthru
      _
    %379 = sfence
    %380 = vsyncpa [#allocation3], 1
    %381 = vsyncpa [#allocation4], 1

</llo_original>
